<compile_context>
chip_gen: v5e
topology: v5e:2x2
jax: 0.10.0
libtpu: 0.0.40
codegen_flags: <defaults>
</compile_context>

<pallas_src>
import jax
import jax.numpy as jnp
from jax.experimental import pallas as pl
from jax.experimental.pallas import tpu as pltpu


OUT_PAD = 128     # fc3 lane padding (softmax width inside the kernel)
OUT_SUB = 8       # sublane-padded rows of the transposed (OUT_SUB, B) output slab
NEG_MASK = -1e30  # baked into padded fc3 bias lanes (finite: no -inf/NaN risk)
ROW_ALIGN = 128   # batch rows padded to a multiple of 128 (full MXU M-dim, clean transpose)


def _actor_kernel(x_ref, w1_ref, b1_ref, w2_ref, b2_ref, w3_ref, b3_ref, o_ref):
    # fc1 + relu   (dropout = identity in eval mode)
    x = x_ref[...].astype(jnp.bfloat16)          # no-op when caller already feeds bf16
    h1 = jnp.dot(x, w1_ref[...], preferred_element_type=jnp.float32) + b1_ref[...]
    h1 = jnp.maximum(h1, 0.0).astype(jnp.bfloat16)

    # fc2 + relu   (dropout = identity in eval mode)
    h2 = jnp.dot(h1, w2_ref[...], preferred_element_type=jnp.float32) + b2_ref[...]
    h2 = jnp.maximum(h2, 0.0).astype(jnp.bfloat16)

    # fc3: lane-padded to OUT_PAD; padded lanes come out of the bias add at NEG_MASK,
    # so no iota/where mask is needed before the softmax.
    logits = jnp.dot(h2, w3_ref[...], preferred_element_type=jnp.float32) + b3_ref[...]

    # Softmax over lanes (padded lanes: exp(~-1e30) == 0).  Exact divide: the EUP exp
    # dominates, and exact division keeps f32-level agreement with the reference.
    m = jnp.max(logits, axis=-1, keepdims=True)
    e = jnp.exp(logits - m)
    s = jnp.sum(e, axis=-1, keepdims=True)
    p = e / s

    # Transposed, sublane-padded store: (tb, 128) -> (128, tb) through the XLU (idle
    # in this kernel), keep the first OUT_SUB sublanes.  HBM writeback drops from
    # 512 B/row to 32 B/row and stays lane-dense (tb is a multiple of 128).
    o_ref[...] = jnp.transpose(p)[:OUT_SUB, :]


def _round_up(n, m):
    return ((n + m - 1) // m) * m


def _cdiv(a, b):
    return (a + b - 1) // b


def actor_forward(x, params, *, n_out, tile_b=1024, core_parallel=False,
                  return_padded=False):
    """Forward pass of ActorNetwork.

    x: [B, input_size], f32 or bf16 (bf16 is consumed as-is: no wrapper-side cast).
    Returns softmax probs [B, n_out] f32, or — with return_padded=True — the raw
    kernel output: a transposed (OUT_SUB, padded_B) f32 slab whose first n_out rows
    and first B columns are the real probabilities (rest is padding; ignore it).
    core_parallel=True (v7x) puts the batch axis on pltpu.CORE_PARALLEL with an even
    number (>=2) of grid steps so both TensorCores get work.
    """
    w1, b1, w2, b2, w3p, b3p = params
    B, in_f = x.shape
    hid = w1.shape[1]

    rows = _round_up(B, ROW_ALIGN)
    if core_parallel and rows > ROW_ALIGN:
        steps = 2 * _cdiv(rows, 2 * tile_b)                 # even, >= 2
        tb = _round_up(_cdiv(rows, steps), ROW_ALIGN)
    else:
        # Grow the tile toward the whole (row-aligned) batch: per-tile VMEM is only
        # ~0.3 MB even at tb=2048, while every extra grid step costs ~0.35 us, so
        # fewer/bigger steps win on all generations (incl. v7x's 64 MiB VMEM).
        tb = min(tile_b, rows)
    padded_b = _round_up(B, tb)
    if padded_b != B:
        x = jnp.pad(x, ((0, padded_b - B), (0, 0)))
    grid = (padded_b // tb,)

    # Constant index_map -> weights/biases DMA'd once, resident in VMEM across steps
    # (Pallas skips re-copies when the block index does not change).
    resident = lambda arr: pl.BlockSpec(arr.shape, lambda i: (0, 0))

    flops = 2 * padded_b * (in_f * hid + hid * hid + hid * OUT_PAD)
    bytes_accessed = (x.size * x.dtype.itemsize
                      + sum(a.size * a.dtype.itemsize for a in params)
                      + OUT_SUB * padded_b * 4)

    dims = (pltpu.CORE_PARALLEL,) if core_parallel else ("parallel",)

    out = pl.pallas_call(
        _actor_kernel,
        out_shape=jax.ShapeDtypeStruct((OUT_SUB, padded_b), jnp.float32),
        grid=grid,
        in_specs=[
            pl.BlockSpec((tb, in_f), lambda i: (i, 0)),     # x: tiled over batch
            resident(w1), resident(b1),
            resident(w2), resident(b2),
            resident(w3p), resident(b3p),
        ],
        out_specs=pl.BlockSpec((OUT_SUB, tb), lambda i: (0, i)),
        compiler_params=pltpu.CompilerParams(dimension_semantics=dims),
        cost_estimate=pl.CostEstimate(
            flops=flops,
            transcendentals=padded_b * OUT_PAD,
            bytes_accessed=bytes_accessed),
    )(x, w1, b1, w2, b2, w3p, b3p)

    if return_padded:
        return out
    # Tiny unpad: touches only OUT_SUB*padded_b*4 bytes (no second full-HBM pass).
    return out[:n_out, :B].T


def _xavier_uniform(key, fan_in, fan_out, gain=1.0):
    # Matches torch.nn.init.xavier_uniform_: U(-a, a), a = gain*sqrt(6/(fan_in+fan_out))
    a = gain * jnp.sqrt(6.0 / (fan_in + fan_out))
    return jax.random.uniform(key, (fan_in, fan_out), jnp.float32, -a, a)


def init_actor_params(key, input_size, hidden_size=128, output_size=3):
    k1, k2, k3 = jax.random.split(key, 3)
    # Stored transposed vs PyTorch ([in, out]) so the kernel computes x @ W + b.
    # Weights bf16 (MXU-native, f32 accumulate); biases f32.
    w1 = _xavier_uniform(k1, input_size, hidden_size).astype(jnp.bfloat16)
    b1 = jnp.zeros((1, hidden_size), jnp.float32)
    w2 = _xavier_uniform(k2, hidden_size, hidden_size).astype(jnp.bfloat16)
    b2 = jnp.zeros((1, hidden_size), jnp.float32)
    w3 = _xavier_uniform(k3, hidden_size, output_size, gain=0.1).astype(jnp.bfloat16)
    b3 = jnp.zeros((1, output_size), jnp.float32)
    # Lane-pad fc3 to OUT_PAD; the softmax padding mask is baked into b3p
    # (padded lanes = NEG_MASK), so the kernel needs no iota/where.
    w3p = jnp.zeros((hidden_size, OUT_PAD), jnp.bfloat16).at[:, :output_size].set(w3)
    b3p = jnp.full((1, OUT_PAD), NEG_MASK, jnp.float32).at[:, :output_size].set(b3)
    return (w1, b1, w2, b2, w3p, b3p)


def actor_reference(x, params, *, n_out):
    """Plain-JAX reference mirroring the kernel math (bf16 matmul operands,
    f32 accumulation, eval-mode dropout, padded-lane softmax)."""
    w1, b1, w2, b2, w3p, b3p = params
    h1 = jnp.maximum(jnp.dot(x.astype(jnp.bfloat16), w1,
                             preferred_element_type=jnp.float32) + b1, 0.0)
    h2 = jnp.maximum(jnp.dot(h1.astype(jnp.bfloat16), w2,
                             preferred_element_type=jnp.float32) + b2, 0.0)
    logits = jnp.dot(h2.astype(jnp.bfloat16), w3p,
                     preferred_element_type=jnp.float32) + b3p
    return jax.nn.softmax(logits, axis=-1)[:, :n_out]


if __name__ == "__main__":
    key = jax.random.PRNGKey(0)
    k_x, k_x2, k_p = jax.random.split(key, 3)

    input_size, hidden_size, output_size = 32, 128, 3
    params = init_actor_params(k_p, input_size, hidden_size, output_size)

    # Path 1: single-tile path (B=64 -> one 128-row tile, grid=(1,)).
    x = jax.random.normal(k_x, (64, input_size), jnp.float32)
    probs = jax.block_until_ready(actor_forward(x, params, n_out=output_size))
    ref = actor_reference(x, params, n_out=output_size)
    assert probs.shape == (64, output_size)
    assert jnp.allclose(jnp.sum(probs, axis=-1), 1.0, atol=1e-5)
    assert jnp.allclose(probs, ref, atol=1e-3, rtol=1e-3)

    # Path 2: multi-step pipelined grid (B=300 -> padded to 384, tb=128, grid=(3,)),
    # exercising row padding and the resident-weights pipeline.
    x2 = jax.random.normal(k_x2, (300, input_size), jnp.float32)
    probs2 = jax.block_until_ready(
        actor_forward(x2, params, n_out=output_size, tile_b=128))
    ref2 = actor_reference(x2, params, n_out=output_size)
    assert probs2.shape == (300, output_size)
    assert jnp.allclose(probs2, ref2, atol=1e-3, rtol=1e-3)

    # Path 3: bf16 activations from the upstream producer (no wrapper cast; the
    # in-kernel astype is a no-op), halving the input DMA.
    probs_bf16_in = jax.block_until_ready(
        actor_forward(x.astype(jnp.bfloat16), params, n_out=output_size))
    assert jnp.allclose(probs_bf16_in, ref, atol=1e-3, rtol=1e-3)

    # TODO(synk): training-mode dropout (random masking with pltpu.prng_*) not
    # implemented; forward matches nn.Dropout in eval() (identity).
    print("KERNEL_OK")
</pallas_src>

<mosaic_0001>
module attributes {stable_mosaic.version = 11 : i64} {
  func.func @_actor_kernel(%arg0: i32, %arg1: memref<128x32xf32, #tpu.memory_space<vmem>>, %arg2: memref<32x128xbf16, #tpu.memory_space<vmem>>, %arg3: memref<1x128xf32, #tpu.memory_space<vmem>>, %arg4: memref<128x128xbf16, #tpu.memory_space<vmem>>, %arg5: memref<1x128xf32, #tpu.memory_space<vmem>>, %arg6: memref<128x128xbf16, #tpu.memory_space<vmem>>, %arg7: memref<1x128xf32, #tpu.memory_space<vmem>>, %arg8: memref<8x128xf32, #tpu.memory_space<vmem>>) attributes {dimension_semantics = [#tpu.dimension_semantics<parallel>], iteration_bounds = array<i64: 1>, scalar_prefetch = 0 : i64, scratch_operands = 0 : i64, tpu.core_type = #tpu.core_type<tc>, window_params = [{transform_indices = @transform_0, window_bounds = array<i64: 128, 32>}, {pipeline_mode = #tpu.pipeline_mode<synchronous>, transform_indices = @transform_1, window_bounds = array<i64: 32, 128>}, {pipeline_mode = #tpu.pipeline_mode<synchronous>, transform_indices = @transform_2, window_bounds = array<i64: 1, 128>}, {pipeline_mode = #tpu.pipeline_mode<synchronous>, transform_indices = @transform_3, window_bounds = array<i64: 128, 128>}, {pipeline_mode = #tpu.pipeline_mode<synchronous>, transform_indices = @transform_4, window_bounds = array<i64: 1, 128>}, {pipeline_mode = #tpu.pipeline_mode<synchronous>, transform_indices = @transform_5, window_bounds = array<i64: 128, 128>}, {pipeline_mode = #tpu.pipeline_mode<synchronous>, transform_indices = @transform_6, window_bounds = array<i64: 1, 128>}, {transform_indices = @transform_7, window_bounds = array<i64: 8, 128>}]} {
    %c0 = arith.constant 0 : index
    %c0_0 = arith.constant 0 : index
    %0 = vector.load %arg1[%c0, %c0_0] : memref<128x32xf32, #tpu.memory_space<vmem>>, vector<128x32xf32>
    %1 = arith.truncf %0 : vector<128x32xf32> to vector<128x32xbf16>
    %c0_1 = arith.constant 0 : index
    %c0_2 = arith.constant 0 : index
    %2 = vector.load %arg2[%c0_1, %c0_2] : memref<32x128xbf16, #tpu.memory_space<vmem>>, vector<32x128xbf16>
    %cst = arith.constant dense<0.000000e+00> : vector<128x128xf32>
    %3 = tpu.matmul %1, %2, %cst {dimension_numbers = #tpu.dot_dimension_numbers<[1], [0], [0], [1], [0, 0, 1, 1], [], []>} : vector<128x32xbf16>, vector<32x128xbf16>, vector<128x128xf32> -> vector<128x128xf32>
    %c0_3 = arith.constant 0 : index
    %c0_4 = arith.constant 0 : index
    %4 = vector.load %arg3[%c0_3, %c0_4] : memref<1x128xf32, #tpu.memory_space<vmem>>, vector<1x128xf32>
    %5 = vector.broadcast %4 : vector<1x128xf32> to vector<128x128xf32>
    %6 = arith.addf %3, %5 : vector<128x128xf32>
    %cst_5 = arith.constant 0.000000e+00 : f32
    %7 = vector.broadcast %cst_5 : f32 to vector<128x128xf32>
    %8 = arith.maximumf %6, %7 : vector<128x128xf32>
    %9 = arith.truncf %8 : vector<128x128xf32> to vector<128x128xbf16>
    %c0_6 = arith.constant 0 : index
    %c0_7 = arith.constant 0 : index
    %10 = vector.load %arg4[%c0_6, %c0_7] : memref<128x128xbf16, #tpu.memory_space<vmem>>, vector<128x128xbf16>
    %cst_8 = arith.constant dense<0.000000e+00> : vector<128x128xf32>
    %11 = tpu.matmul %9, %10, %cst_8 {dimension_numbers = #tpu.dot_dimension_numbers<[1], [0], [0], [1], [0, 0, 1, 1], [], []>} : vector<128x128xbf16>, vector<128x128xbf16>, vector<128x128xf32> -> vector<128x128xf32>
    %c0_9 = arith.constant 0 : index
    %c0_10 = arith.constant 0 : index
    %12 = vector.load %arg5[%c0_9, %c0_10] : memref<1x128xf32, #tpu.memory_space<vmem>>, vector<1x128xf32>
    %13 = vector.broadcast %12 : vector<1x128xf32> to vector<128x128xf32>
    %14 = arith.addf %11, %13 : vector<128x128xf32>
    %cst_11 = arith.constant 0.000000e+00 : f32
    %15 = vector.broadcast %cst_11 : f32 to vector<128x128xf32>
    %16 = arith.maximumf %14, %15 : vector<128x128xf32>
    %17 = arith.truncf %16 : vector<128x128xf32> to vector<128x128xbf16>
    %c0_12 = arith.constant 0 : index
    %c0_13 = arith.constant 0 : index
    %18 = vector.load %arg6[%c0_12, %c0_13] : memref<128x128xbf16, #tpu.memory_space<vmem>>, vector<128x128xbf16>
    %cst_14 = arith.constant dense<0.000000e+00> : vector<128x128xf32>
    %19 = tpu.matmul %17, %18, %cst_14 {dimension_numbers = #tpu.dot_dimension_numbers<[1], [0], [0], [1], [0, 0, 1, 1], [], []>} : vector<128x128xbf16>, vector<128x128xbf16>, vector<128x128xf32> -> vector<128x128xf32>
    %c0_15 = arith.constant 0 : index
    %c0_16 = arith.constant 0 : index
    %20 = vector.load %arg7[%c0_15, %c0_16] : memref<1x128xf32, #tpu.memory_space<vmem>>, vector<1x128xf32>
    %21 = vector.broadcast %20 : vector<1x128xf32> to vector<128x128xf32>
    %22 = arith.addf %19, %21 : vector<128x128xf32>
    %cst_17 = arith.constant dense<0xFF800000> : vector<128xf32>
    %23 = vector.multi_reduction <maximumf>, %22, %cst_17 [1] : vector<128x128xf32> to vector<128xf32>
    %24 = vector.shape_cast %23 : vector<128xf32> to vector<128x1xf32>
    %25 = vector.broadcast %24 : vector<128x1xf32> to vector<128x128xf32>
    %26 = arith.subf %22, %25 : vector<128x128xf32>
    %27 = math.exp %26 : vector<128x128xf32>
    %cst_18 = arith.constant dense<0.000000e+00> : vector<128xf32>
    %28 = vector.multi_reduction <add>, %27, %cst_18 [1] : vector<128x128xf32> to vector<128xf32>
    %29 = vector.shape_cast %28 : vector<128xf32> to vector<128x1xf32>
    %30 = vector.broadcast %29 : vector<128x1xf32> to vector<128x128xf32>
    %31 = arith.divf %27, %30 : vector<128x128xf32>
    %32 = tpu.transpose %31, [1, 0] : vector<128x128xf32> -> vector<128x128xf32>
    %33 = vector.extract_strided_slice %32 {offsets = [0, 0], sizes = [8, 128], strides = [1, 1]} : vector<128x128xf32> to vector<8x128xf32>
    %c0_19 = arith.constant 0 : index
    %c0_20 = arith.constant 0 : index
    %34 = vector.load %arg8[%c0_19, %c0_20] : memref<8x128xf32, #tpu.memory_space<vmem>>, vector<8x128xf32>
    tpu.vector_store %arg8[%c0_19, %c0_20], %33 {strides = array<i32>} : memref<8x128xf32, #tpu.memory_space<vmem>>, vector<8x128xf32>,
    return
  }
  func.func @transform_0(%arg0: i32) -> (i32, i32) {
    %c0_i32 = arith.constant 0 : i32
    %c0_i32_0 = arith.constant 0 : i32
    return %arg0, %c0_i32 : i32, i32
  }
  func.func @transform_1(%arg0: i32) -> (i32, i32) {
    %c0_i32 = arith.constant 0 : i32
    %c0_i32_0 = arith.constant 0 : i32
    %c0_i32_1 = arith.constant 0 : i32
    return %c0_i32, %c0_i32_0 : i32, i32
  }
  func.func @transform_2(%arg0: i32) -> (i32, i32) {
    %c0_i32 = arith.constant 0 : i32
    %c0_i32_0 = arith.constant 0 : i32
    %c0_i32_1 = arith.constant 0 : i32
    return %c0_i32, %c0_i32_0 : i32, i32
  }
  func.func @transform_3(%arg0: i32) -> (i32, i32) {
    %c0_i32 = arith.constant 0 : i32
    %c0_i32_0 = arith.constant 0 : i32
    %c0_i32_1 = arith.constant 0 : i32
    return %c0_i32, %c0_i32_0 : i32, i32
  }
  func.func @transform_4(%arg0: i32) -> (i32, i32) {
    %c0_i32 = arith.constant 0 : i32
    %c0_i32_0 = arith.constant 0 : i32
    %c0_i32_1 = arith.constant 0 : i32
    return %c0_i32, %c0_i32_0 : i32, i32
  }
  func.func @transform_5(%arg0: i32) -> (i32, i32) {
    %c0_i32 = arith.constant 0 : i32
    %c0_i32_0 = arith.constant 0 : i32
    %c0_i32_1 = arith.constant 0 : i32
    return %c0_i32, %c0_i32_0 : i32, i32
  }
  func.func @transform_6(%arg0: i32) -> (i32, i32) {
    %c0_i32 = arith.constant 0 : i32
    %c0_i32_0 = arith.constant 0 : i32
    %c0_i32_1 = arith.constant 0 : i32
    return %c0_i32, %c0_i32_0 : i32, i32
  }
  func.func @transform_7(%arg0: i32) -> (i32, i32) {
    %c0_i32 = arith.constant 0 : i32
    %c0_i32_0 = arith.constant 0 : i32
    return %c0_i32, %arg0 : i32, i32
  }
}

</mosaic_0001>

<llo_original>
// kernel: tpu_custom_call.1
$region0: #{tpu_custom_call.1}
  #allocation0 [shape = 'u32[]', space=smem, size = 0x4, offset = 0x4, fixed_abs, tag = 'smem constant byte address 0x4 - core index']
  #allocation1 [shape = 'u32[72,128]{1,0:T(1,128)}', space=vmem, size = 0x9000, scoped, tag = 'internal scratch']
  %s0 = inlined_call_operand.vmem [shape: f32[128,32], index: 0, kind: input, shape index: {}]
  %s1 = inlined_call_operand.vmem [shape: bf16[32,128], index: 1, kind: input, shape index: {}]
  %s2 = inlined_call_operand.vmem [shape: f32[1,128], index: 2, kind: input, shape index: {}]
  %s3 = inlined_call_operand.vmem [shape: bf16[128,128], index: 3, kind: input, shape index: {}]
  %s4 = inlined_call_operand.vmem [shape: f32[1,128], index: 4, kind: input, shape index: {}]
  %s5 = inlined_call_operand.vmem [shape: bf16[128,128], index: 5, kind: input, shape index: {}]
  %s6 = inlined_call_operand.vmem [shape: f32[1,128], index: 6, kind: input, shape index: {}]
  %s7 = inlined_call_operand.hbm [shape: f32[8,128], index: 7, kind: output, shape index: {}]
  %s8 = sld [smem:[#allocation0]]
  $region38: #{tpu_custom_call.1} parent=0
    _
  %s10 = ssub.s32 1, %s8
  %s11 = scalar_select 0, %s10, %s8
  $region1: #{tpu_custom_call.1} parent=0
    #allocation2 [shape = 'u8[4096]{0}', space=vmem, size = 0x1000, scoped, tag = 'output window, operand 0, single buffered']
    #allocation3 [shape = 's32[1]{0}', space=sflag, size = 0x4, scoped, tag = 'scoped memory for tpu_custom_call.1']
    %12 = vsyncpa [#allocation3], 0
    // Predicated region
    $region2: #{tpu_custom_call.1} parent=1 // pred_check
      _
    $region3: #{tpu_custom_call.1} parent=1 // pred_check_branch
      %14 = sbr.rel (0) target = $region5
    $region4: #{tpu_custom_call.1} parent=1 // pred_region
      _
    $region5: #{tpu_custom_call.1} parent=1 // pred_fallthru
      _
    // Predicated region
    $region6: #{tpu_custom_call.1} parent=1 // pred_check
      _
    $region7: #{tpu_custom_call.1} parent=1 // pred_check_branch
      %16 = sbr.rel (0) target = $region9
    $region8: #{tpu_custom_call.1} parent=1 // pred_region
      _
    $region9: #{tpu_custom_call.1} parent=1 // pred_fallthru
      _
    // Predicated region
    $region10: #{tpu_custom_call.1} parent=1 // pred_check
      _
    $region11: #{tpu_custom_call.1} parent=1 // pred_check_branch
      %18 = sbr.rel (0) target = $region13
    $region12: #{tpu_custom_call.1} parent=1 // pred_region
      _
    $region13: #{tpu_custom_call.1} parent=1 // pred_fallthru
      _
    // Predicated region
    $region14: #{tpu_custom_call.1} parent=1 // pred_check
      _
    $region15: #{tpu_custom_call.1} parent=1 // pred_check_branch
      %20 = sbr.rel (0) target = $region17
    $region16: #{tpu_custom_call.1} parent=1 // pred_region
      _
    $region17: #{tpu_custom_call.1} parent=1 // pred_fallthru
      _
    // Predicated region
    $region18: #{tpu_custom_call.1} parent=1 // pred_check
      _
    $region19: #{tpu_custom_call.1} parent=1 // pred_check_branch
      %22 = sbr.rel (0) target = $region21
    $region20: #{tpu_custom_call.1} parent=1 // pred_region
      _
    $region21: #{tpu_custom_call.1} parent=1 // pred_fallthru
      _
    // Predicated region
    $region22: #{tpu_custom_call.1} parent=1 // pred_check
      _
    $region23: #{tpu_custom_call.1} parent=1 // pred_check_branch
      %24 = sbr.rel (0) target = $region25
    $region24: #{tpu_custom_call.1} parent=1 // pred_region
      _
    $region25: #{tpu_custom_call.1} parent=1 // pred_fallthru
      _
    // Predicated region
    $region26: #{tpu_custom_call.1} parent=1 // pred_check
      _
    $region27: #{tpu_custom_call.1} parent=1 // pred_check_branch
      %26 = sbr.rel (0) target = $region29
    $region28: #{tpu_custom_call.1} parent=1 // pred_region
      _
    $region29: #{tpu_custom_call.1} parent=1 // pred_fallthru
      _
    %v28 = vld [vmem:[%s0] sm:$0xff]
    %v29 = vld [vmem:[%s0 + $0x8] sm:$0xff]
    %v30 = vld [vmem:[%s0 + $0x10] sm:$0xff]
    %v31 = vld [vmem:[%s0 + $0x18] sm:$0xff]
    %v32 = vld [vmem:[%s0 + $0x20] sm:$0xff]
    %v33 = vld [vmem:[%s0 + $0x28] sm:$0xff]
    %v34 = vld [vmem:[%s0 + $0x30] sm:$0xff]
    %v35 = vld [vmem:[%s0 + $0x38] sm:$0xff]
    %v36 = vld [vmem:[%s0 + $0x40] sm:$0xff]
    %v37 = vld [vmem:[%s0 + $0x48] sm:$0xff]
    %v38 = vld [vmem:[%s0 + $0x50] sm:$0xff]
    %v39 = vld [vmem:[%s0 + $0x58] sm:$0xff]
    %v40 = vld [vmem:[%s0 + $0x60] sm:$0xff]
    %v41 = vld [vmem:[%s0 + $0x68] sm:$0xff]
    %v42 = vld [vmem:[%s0 + $0x70] sm:$0xff]
    %v43 = vld [vmem:[%s0 + $0x78] sm:$0xff]
    %v44 = vpack.c.bf16 %v29, %v28
    %v45 = vpack.c.bf16 %v31, %v30
    %v46 = vpack.c.bf16 %v33, %v32
    %v47 = vpack.c.bf16 %v35, %v34
    %v48 = vpack.c.bf16 %v37, %v36
    %v49 = vpack.c.bf16 %v39, %v38
    %v50 = vpack.c.bf16 %v41, %v40
    %v51 = vpack.c.bf16 %v43, %v42
    %v52 = vld [vmem:[%s1] sm:$0xf]
    %v53 = vld [vmem:[%s1 + $0x4] sm:$0xf]
    %v54 = vld [vmem:[%s1 + $0x8] sm:$0xf]
    %v55 = vld [vmem:[%s1 + $0xc] sm:$0xf]
    %v56 = vld [vmem:[%s2] sm:$0x1]
    %v58 = vperm.slane %v56, 0
    %v64 = vunpack.c.l.b16 %v52
    %v65 = vunpack.c.l.b16 %v53
    %v66 = vunpack.c.l.b16 %v54
    %v67 = vunpack.c.l.b16 %v55
    %v68 = vpack.c.b16 %v65, %v64
    %v69 = vpack.c.b16 %v67, %v66
    %vm72 = vcmask 261120
    %v74 = vsel %vm72, %v44, 0
    %v77 = vsel %vm72, %v45, 0
    %v80 = vsel %vm72, %v46, 0
    %v83 = vsel %vm72, %v47, 0
    %v86 = vsel %vm72, %v48, 0
    %v89 = vsel %vm72, %v49, 0
    %v92 = vsel %vm72, %v50, 0
    %v95 = vsel %vm72, %v51, 0
    %97 = vmatpush.bf16.msra.mxu0 0
    %98 = vmatpush.bf16.msra.mxu0 0
    %99 = vmatpush.bf16.msra.mxu0 0
    %100 = vmatpush.bf16.msra.mxu0 0
    %101 = vmatpush.bf16.msra.mxu0 0
    %102 = vmatpush.bf16.msra.mxu0 0
    %103 = vmatpush.bf16.msra.mxu0 %v69
    %104 = vmatpush.bf16.msra.mxu0 %v68
    %105 = vmatmul.bf16.gmra.mxu0 %v74
    %v106 = vpop.f32.mrf.mxu0
    %v107 = vadd.f32 %v58, %v106
    %v108 = vpop.f32.mrf.mxu0
    %v109 = vadd.f32 %v58, %v108
    %110 = vmatmul.bf16.gmra.mxu0 %v77
    %v111 = vpop.f32.mrf.mxu0
    %v112 = vadd.f32 %v58, %v111
    %v113 = vpop.f32.mrf.mxu0
    %v114 = vadd.f32 %v58, %v113
    %115 = vmatmul.bf16.gmra.mxu0 %v80
    %v116 = vpop.f32.mrf.mxu0
    %v117 = vadd.f32 %v58, %v116
    %v118 = vpop.f32.mrf.mxu0
    %v119 = vadd.f32 %v58, %v118
    %120 = vmatmul.bf16.gmra.mxu0 %v83
    %v121 = vpop.f32.mrf.mxu0
    %v122 = vadd.f32 %v58, %v121
    %v123 = vpop.f32.mrf.mxu0
    %v124 = vadd.f32 %v58, %v123
    %125 = vmatmul.bf16.gmra.mxu0 %v86
    %v126 = vpop.f32.mrf.mxu0
    %v127 = vadd.f32 %v58, %v126
    %v128 = vpop.f32.mrf.mxu0
    %v129 = vadd.f32 %v58, %v128
    %130 = vmatmul.bf16.gmra.mxu0 %v89
    %v131 = vpop.f32.mrf.mxu0
    %v132 = vadd.f32 %v58, %v131
    %v133 = vpop.f32.mrf.mxu0
    %v134 = vadd.f32 %v58, %v133
    %135 = vmatmul.bf16.gmra.mxu0 %v92
    %v136 = vpop.f32.mrf.mxu0
    %v137 = vadd.f32 %v58, %v136
    %v138 = vpop.f32.mrf.mxu0
    %v139 = vadd.f32 %v58, %v138
    %140 = vmatmul.bf16.gmra.mxu0 %v95
    %v141 = vpop.f32.mrf.mxu0
    %v142 = vadd.f32 %v58, %v141
    %v143 = vpop.f32.mrf.mxu0
    %v144 = vadd.f32 %v58, %v143
    %145 = vdwg.mxu0
    %v146 = vmax.f32 %v107, 0.0
    %v147 = vmax.f32 %v109, 0.0
    %v148 = vmax.f32 %v112, 0.0
    %v149 = vmax.f32 %v114, 0.0
    %v150 = vmax.f32 %v117, 0.0
    %v151 = vmax.f32 %v119, 0.0
    %v152 = vmax.f32 %v122, 0.0
    %v153 = vmax.f32 %v124, 0.0
    %v154 = vmax.f32 %v127, 0.0
    %v155 = vmax.f32 %v129, 0.0
    %v156 = vmax.f32 %v132, 0.0
    %v157 = vmax.f32 %v134, 0.0
    %v158 = vmax.f32 %v137, 0.0
    %v159 = vmax.f32 %v139, 0.0
    %v160 = vmax.f32 %v142, 0.0
    %v161 = vmax.f32 %v144, 0.0
    %v162 = vpack.c.bf16 %v147, %v146
    %v163 = vpack.c.bf16 %v149, %v148
    %v164 = vpack.c.bf16 %v151, %v150
    %v165 = vpack.c.bf16 %v153, %v152
    %v166 = vpack.c.bf16 %v155, %v154
    %v167 = vpack.c.bf16 %v157, %v156
    %v168 = vpack.c.bf16 %v159, %v158
    %v169 = vpack.c.bf16 %v161, %v160
    %v170 = vld [vmem:[%s3] sm:$0xf]
    %v171 = vld [vmem:[%s3 + $0x4] sm:$0xf]
    %v172 = vld [vmem:[%s3 + $0x8] sm:$0xf]
    %v173 = vld [vmem:[%s3 + $0xc] sm:$0xf]
    %v174 = vld [vmem:[%s3 + $0x10] sm:$0xf]
    %v175 = vld [vmem:[%s3 + $0x14] sm:$0xf]
    %v176 = vld [vmem:[%s3 + $0x18] sm:$0xf]
    %v177 = vld [vmem:[%s3 + $0x1c] sm:$0xf]
    %v178 = vld [vmem:[%s3 + $0x20] sm:$0xf]
    %v179 = vld [vmem:[%s3 + $0x24] sm:$0xf]
    %v180 = vld [vmem:[%s3 + $0x28] sm:$0xf]
    %v181 = vld [vmem:[%s3 + $0x2c] sm:$0xf]
    %v182 = vld [vmem:[%s3 + $0x30] sm:$0xf]
    %v183 = vld [vmem:[%s3 + $0x34] sm:$0xf]
    %v184 = vld [vmem:[%s3 + $0x38] sm:$0xf]
    %v185 = vld [vmem:[%s3 + $0x3c] sm:$0xf]
    %v186 = vld [vmem:[%s4] sm:$0x1]
    %v188 = vperm.slane %v186, 0
    %v206 = vunpack.c.l.b16 %v170
    %v207 = vunpack.c.l.b16 %v171
    %v208 = vunpack.c.l.b16 %v172
    %v209 = vunpack.c.l.b16 %v173
    %v210 = vunpack.c.l.b16 %v174
    %v211 = vunpack.c.l.b16 %v175
    %v212 = vunpack.c.l.b16 %v176
    %v213 = vunpack.c.l.b16 %v177
    %v214 = vunpack.c.l.b16 %v178
    %v215 = vunpack.c.l.b16 %v179
    %v216 = vunpack.c.l.b16 %v180
    %v217 = vunpack.c.l.b16 %v181
    %v218 = vunpack.c.l.b16 %v182
    %v219 = vunpack.c.l.b16 %v183
    %v220 = vunpack.c.l.b16 %v184
    %v221 = vunpack.c.l.b16 %v185
    %v222 = vpack.c.b16 %v207, %v206
    %v223 = vpack.c.b16 %v209, %v208
    %v224 = vpack.c.b16 %v211, %v210
    %v225 = vpack.c.b16 %v213, %v212
    %v226 = vpack.c.b16 %v215, %v214
    %v227 = vpack.c.b16 %v217, %v216
    %v228 = vpack.c.b16 %v219, %v218
    %v229 = vpack.c.b16 %v221, %v220
    %238 = vmatpush.bf16.msra.mxu0 %v229
    %239 = vmatpush.bf16.msra.mxu0 %v228
    %240 = vmatpush.bf16.msra.mxu0 %v227
    %241 = vmatpush.bf16.msra.mxu0 %v226
    %242 = vmatpush.bf16.msra.mxu0 %v225
    %243 = vmatpush.bf16.msra.mxu0 %v224
    %244 = vmatpush.bf16.msra.mxu0 %v223
    %245 = vmatpush.bf16.msra.mxu0 %v222
    %246 = vmatmul.bf16.gmra.mxu0 %v162
    %v247 = vpop.f32.mrf.mxu0
    %v248 = vadd.f32 %v188, %v247
    %v249 = vpop.f32.mrf.mxu0
    %v250 = vadd.f32 %v188, %v249
    %251 = vmatmul.bf16.gmra.mxu0 %v163
    %v252 = vpop.f32.mrf.mxu0
    %v253 = vadd.f32 %v188, %v252
    %v254 = vpop.f32.mrf.mxu0
    %v255 = vadd.f32 %v188, %v254
    %256 = vmatmul.bf16.gmra.mxu0 %v164
    %v257 = vpop.f32.mrf.mxu0
    %v258 = vadd.f32 %v188, %v257
    %v259 = vpop.f32.mrf.mxu0
    %v260 = vadd.f32 %v188, %v259
    %261 = vmatmul.bf16.gmra.mxu0 %v165
    %v262 = vpop.f32.mrf.mxu0
    %v263 = vadd.f32 %v188, %v262
    %v264 = vpop.f32.mrf.mxu0
    %v265 = vadd.f32 %v188, %v264
    %266 = vmatmul.bf16.gmra.mxu0 %v166
    %v267 = vpop.f32.mrf.mxu0
    %v268 = vadd.f32 %v188, %v267
    %v269 = vpop.f32.mrf.mxu0
    %v270 = vadd.f32 %v188, %v269
    %271 = vmatmul.bf16.gmra.mxu0 %v167
    %v272 = vpop.f32.mrf.mxu0
    %v273 = vadd.f32 %v188, %v272
    %v274 = vpop.f32.mrf.mxu0
    %v275 = vadd.f32 %v188, %v274
    %276 = vmatmul.bf16.gmra.mxu0 %v168
    %v277 = vpop.f32.mrf.mxu0
    %v278 = vadd.f32 %v188, %v277
    %v279 = vpop.f32.mrf.mxu0
    %v280 = vadd.f32 %v188, %v279
    %281 = vmatmul.bf16.gmra.mxu0 %v169
    %v282 = vpop.f32.mrf.mxu0
    %v283 = vadd.f32 %v188, %v282
    %v284 = vpop.f32.mrf.mxu0
    %v285 = vadd.f32 %v188, %v284
    %286 = vdwg.mxu0
    %v287 = vmax.f32 %v248, 0.0
    %v288 = vmax.f32 %v250, 0.0
    %v289 = vmax.f32 %v253, 0.0
    %v290 = vmax.f32 %v255, 0.0
    %v291 = vmax.f32 %v258, 0.0
    %v292 = vmax.f32 %v260, 0.0
    %v293 = vmax.f32 %v263, 0.0
    %v294 = vmax.f32 %v265, 0.0
    %v295 = vmax.f32 %v268, 0.0
    %v296 = vmax.f32 %v270, 0.0
    %v297 = vmax.f32 %v273, 0.0
    %v298 = vmax.f32 %v275, 0.0
    %v299 = vmax.f32 %v278, 0.0
    %v300 = vmax.f32 %v280, 0.0
    %v301 = vmax.f32 %v283, 0.0
    %v302 = vmax.f32 %v285, 0.0
    %v303 = vpack.c.bf16 %v288, %v287
    %v304 = vpack.c.bf16 %v290, %v289
    %v305 = vpack.c.bf16 %v292, %v291
    %v306 = vpack.c.bf16 %v294, %v293
    %v307 = vpack.c.bf16 %v296, %v295
    %v308 = vpack.c.bf16 %v298, %v297
    %v309 = vpack.c.bf16 %v300, %v299
    %v310 = vpack.c.bf16 %v302, %v301
    %v311 = vld [vmem:[%s5] sm:$0xf]
    %v312 = vld [vmem:[%s5 + $0x4] sm:$0xf]
    %v313 = vld [vmem:[%s5 + $0x8] sm:$0xf]
    %v314 = vld [vmem:[%s5 + $0xc] sm:$0xf]
    %v315 = vld [vmem:[%s5 + $0x10] sm:$0xf]
    %v316 = vld [vmem:[%s5 + $0x14] sm:$0xf]
    %v317 = vld [vmem:[%s5 + $0x18] sm:$0xf]
    %v318 = vld [vmem:[%s5 + $0x1c] sm:$0xf]
    %v319 = vld [vmem:[%s5 + $0x20] sm:$0xf]
    %v320 = vld [vmem:[%s5 + $0x24] sm:$0xf]
    %v321 = vld [vmem:[%s5 + $0x28] sm:$0xf]
    %v322 = vld [vmem:[%s5 + $0x2c] sm:$0xf]
    %v323 = vld [vmem:[%s5 + $0x30] sm:$0xf]
    %v324 = vld [vmem:[%s5 + $0x34] sm:$0xf]
    %v325 = vld [vmem:[%s5 + $0x38] sm:$0xf]
    %v326 = vld [vmem:[%s5 + $0x3c] sm:$0xf]
    %v327 = vld [vmem:[%s6] sm:$0x1]
    %v329 = vperm.slane %v327, 0
    %v347 = vunpack.c.l.b16 %v311
    %v348 = vunpack.c.l.b16 %v312
    %v349 = vunpack.c.l.b16 %v313
    %v350 = vunpack.c.l.b16 %v314
    %v351 = vunpack.c.l.b16 %v315
    %v352 = vunpack.c.l.b16 %v316
    %v353 = vunpack.c.l.b16 %v317
    %v354 = vunpack.c.l.b16 %v318
    %v355 = vunpack.c.l.b16 %v319
    %v356 = vunpack.c.l.b16 %v320
    %v357 = vunpack.c.l.b16 %v321
    %v358 = vunpack.c.l.b16 %v322
    %v359 = vunpack.c.l.b16 %v323
    %v360 = vunpack.c.l.b16 %v324
    %v361 = vunpack.c.l.b16 %v325
    %v362 = vunpack.c.l.b16 %v326
    %v363 = vpack.c.b16 %v348, %v347
    %v364 = vpack.c.b16 %v350, %v349
    %v365 = vpack.c.b16 %v352, %v351
    %v366 = vpack.c.b16 %v354, %v353
    %v367 = vpack.c.b16 %v356, %v355
    %v368 = vpack.c.b16 %v358, %v357
    %v369 = vpack.c.b16 %v360, %v359
    %v370 = vpack.c.b16 %v362, %v361
    %379 = vmatpush.bf16.msra.mxu0 %v370
    %380 = vmatpush.bf16.msra.mxu0 %v369
    %381 = vmatpush.bf16.msra.mxu0 %v368
    %382 = vmatpush.bf16.msra.mxu0 %v367
    %383 = vmatpush.bf16.msra.mxu0 %v366
    %384 = vmatpush.bf16.msra.mxu0 %v365
    %385 = vmatpush.bf16.msra.mxu0 %v364
    %386 = vmatpush.bf16.msra.mxu0 %v363
    %387 = vmatmul.bf16.gmra.mxu0 %v303
    %v388 = vpop.f32.mrf.mxu0
    %v389 = vadd.f32 %v329, %v388
    %v390 = vpop.f32.mrf.mxu0
    %v391 = vadd.f32 %v329, %v390
    %392 = vmatmul.bf16.gmra.mxu0 %v304
    %v393 = vpop.f32.mrf.mxu0
    %v394 = vadd.f32 %v329, %v393
    %v395 = vpop.f32.mrf.mxu0
    %v396 = vadd.f32 %v329, %v395
    %397 = vmatmul.bf16.gmra.mxu0 %v305
    %v398 = vpop.f32.mrf.mxu0
    %v399 = vadd.f32 %v329, %v398
    %v400 = vpop.f32.mrf.mxu0
    %v401 = vadd.f32 %v329, %v400
    %402 = vmatmul.bf16.gmra.mxu0 %v306
    %v403 = vpop.f32.mrf.mxu0
    %v404 = vadd.f32 %v329, %v403
    %v405 = vpop.f32.mrf.mxu0
    %v406 = vadd.f32 %v329, %v405
    %407 = vmatmul.bf16.gmra.mxu0 %v307
    %v408 = vpop.f32.mrf.mxu0
    %v409 = vadd.f32 %v329, %v408
    %v410 = vpop.f32.mrf.mxu0
    %v411 = vadd.f32 %v329, %v410
    %412 = vmatmul.bf16.gmra.mxu0 %v308
    %v413 = vpop.f32.mrf.mxu0
    %v414 = vadd.f32 %v329, %v413
    %v415 = vpop.f32.mrf.mxu0
    %v416 = vadd.f32 %v329, %v415
    %417 = vmatmul.bf16.gmra.mxu0 %v309
    %v418 = vpop.f32.mrf.mxu0
    %v419 = vadd.f32 %v329, %v418
    %v420 = vpop.f32.mrf.mxu0
    %v421 = vadd.f32 %v329, %v420
    %422 = vmatmul.bf16.gmra.mxu0 %v310
    %v423 = vpop.f32.mrf.mxu0
    %v424 = vadd.f32 %v329, %v423
    %v425 = vpop.f32.mrf.mxu0
    %v426 = vadd.f32 %v329, %v425
    %427 = vdwg.mxu0
    %428 = vmax.xlane.f32.xlu0 %v389
    %v429 = vpop.xlane.xlu0 %428
    %430 = vmax.xlane.f32.xlu0 %v391
    %v431 = vpop.xlane.xlu0 %430
    %432 = vmax.xlane.f32.xlu0 %v394
    %v433 = vpop.xlane.xlu0 %432
    %434 = vmax.xlane.f32.xlu0 %v396
    %v435 = vpop.xlane.xlu0 %434
    %436 = vmax.xlane.f32.xlu0 %v399
    %v437 = vpop.xlane.xlu0 %436
    %438 = vmax.xlane.f32.xlu0 %v401
    %v439 = vpop.xlane.xlu0 %438
    %440 = vmax.xlane.f32.xlu0 %v404
    %v441 = vpop.xlane.xlu0 %440
    %442 = vmax.xlane.f32.xlu0 %v406
    %v443 = vpop.xlane.xlu0 %442
    %444 = vmax.xlane.f32.xlu0 %v409
    %v445 = vpop.xlane.xlu0 %444
    %446 = vmax.xlane.f32.xlu0 %v411
    %v447 = vpop.xlane.xlu0 %446
    %448 = vmax.xlane.f32.xlu0 %v414
    %v449 = vpop.xlane.xlu0 %448
    %450 = vmax.xlane.f32.xlu0 %v416
    %v451 = vpop.xlane.xlu0 %450
    %452 = vmax.xlane.f32.xlu0 %v419
    %v453 = vpop.xlane.xlu0 %452
    %454 = vmax.xlane.f32.xlu0 %v421
    %v455 = vpop.xlane.xlu0 %454
    %456 = vmax.xlane.f32.xlu0 %v424
    %v457 = vpop.xlane.xlu0 %456
    %458 = vmax.xlane.f32.xlu0 %v426
    %v459 = vpop.xlane.xlu0 %458
    %v460 = vsub.f32 %v389, %v429
    %v461 = vsub.f32 %v391, %v431
    %v462 = vsub.f32 %v394, %v433
    %v463 = vsub.f32 %v396, %v435
    %v464 = vsub.f32 %v399, %v437
    %v465 = vsub.f32 %v401, %v439
    %v466 = vsub.f32 %v404, %v441
    %v467 = vsub.f32 %v406, %v443
    %v468 = vsub.f32 %v409, %v445
    %v469 = vsub.f32 %v411, %v447
    %v470 = vsub.f32 %v414, %v449
    %v471 = vsub.f32 %v416, %v451
    %v472 = vsub.f32 %v419, %v453
    %v473 = vsub.f32 %v421, %v455
    %v474 = vsub.f32 %v424, %v457
    %v475 = vsub.f32 %v426, %v459
    %v476 = vmul.f32 %v460, 1.442695
    %v477 = vpow.pop %v476
    %v478 = vmul.f32 %v461, 1.442695
    %v479 = vpow.pop %v478
    %v480 = vmul.f32 %v462, 1.442695
    %v481 = vpow.pop %v480
    %v482 = vmul.f32 %v463, 1.442695
    %v483 = vpow.pop %v482
    %v484 = vmul.f32 %v464, 1.442695
    %v485 = vpow.pop %v484
    %v486 = vmul.f32 %v465, 1.442695
    %v487 = vpow.pop %v486
    %v488 = vmul.f32 %v466, 1.442695
    %v489 = vpow.pop %v488
    %v490 = vmul.f32 %v467, 1.442695
    %v491 = vpow.pop %v490
    %v492 = vmul.f32 %v468, 1.442695
    %v493 = vpow.pop %v492
    %v494 = vmul.f32 %v469, 1.442695
    %v495 = vpow.pop %v494
    %v496 = vmul.f32 %v470, 1.442695
    %v497 = vpow.pop %v496
    %v498 = vmul.f32 %v471, 1.442695
    %v499 = vpow.pop %v498
    %v500 = vmul.f32 %v472, 1.442695
    %v501 = vpow.pop %v500
    %v502 = vmul.f32 %v473, 1.442695
    %v503 = vpow.pop %v502
    %v504 = vmul.f32 %v474, 1.442695
    %v505 = vpow.pop %v504
    %v506 = vmul.f32 %v475, 1.442695
    %v507 = vpow.pop %v506
    %508 = vadd.xlane.f32.xlu0 %v477
    %v509 = vpop.xlane.xlu0 %508
    %510 = vadd.xlane.f32.xlu0 %v479
    %v511 = vpop.xlane.xlu0 %510
    %512 = vadd.xlane.f32.xlu0 %v481
    %v513 = vpop.xlane.xlu0 %512
    %514 = vadd.xlane.f32.xlu0 %v483
    %v515 = vpop.xlane.xlu0 %514
    %516 = vadd.xlane.f32.xlu0 %v485
    %v517 = vpop.xlane.xlu0 %516
    %518 = vadd.xlane.f32.xlu0 %v487
    %v519 = vpop.xlane.xlu0 %518
    %520 = vadd.xlane.f32.xlu0 %v489
    %v521 = vpop.xlane.xlu0 %520
    %522 = vadd.xlane.f32.xlu0 %v491
    %v523 = vpop.xlane.xlu0 %522
    %524 = vadd.xlane.f32.xlu0 %v493
    %v525 = vpop.xlane.xlu0 %524
    %526 = vadd.xlane.f32.xlu0 %v495
    %v527 = vpop.xlane.xlu0 %526
    %528 = vadd.xlane.f32.xlu0 %v497
    %v529 = vpop.xlane.xlu0 %528
    %530 = vadd.xlane.f32.xlu0 %v499
    %v531 = vpop.xlane.xlu0 %530
    %532 = vadd.xlane.f32.xlu0 %v501
    %v533 = vpop.xlane.xlu0 %532
    %534 = vadd.xlane.f32.xlu0 %v503
    %v535 = vpop.xlane.xlu0 %534
    %536 = vadd.xlane.f32.xlu0 %v505
    %v537 = vpop.xlane.xlu0 %536
    %538 = vadd.xlane.f32.xlu0 %v507
    %v539 = vpop.xlane.xlu0 %538
    %v540 = vrcp.pop %v509
    %v541 = vmul.f32 %v509, %v540
    %v542 = vsub.f32 1.0, %v541
    %v543 = vmul.f32 %v540, %v542
    %v544 = vadd.f32 %v540, %v543
    %vm545 = vweird.f32 %v509
    %vm546 = vweird.f32 %v540
    %vm547 = vmor %vm545, %vm546
    %v548 = vsel %vm547, %v540, %v544
    %v549 = vand.u32 2147483647, %v509
    %vm550 = vcmp.eq.f32.partialorder %v549, 8.507059e+37
    %v551 = vand.u32 %v509, 2147483648
    %v552 = vor.u32 1.1754944e-38, %v551
    %v553 = vsel %vm550, %v552, %v548
    %v554 = vmul.f32 %v477, %v553
    %v555 = vrcp.pop %v511
    %v556 = vmul.f32 %v511, %v555
    %v557 = vsub.f32 1.0, %v556
    %v558 = vmul.f32 %v555, %v557
    %v559 = vadd.f32 %v555, %v558
    %vm560 = vweird.f32 %v511
    %vm561 = vweird.f32 %v555
    %vm562 = vmor %vm560, %vm561
    %v563 = vsel %vm562, %v555, %v559
    %v564 = vand.u32 2147483647, %v511
    %vm565 = vcmp.eq.f32.partialorder %v564, 8.507059e+37
    %v566 = vand.u32 %v511, 2147483648
    %v567 = vor.u32 1.1754944e-38, %v566
    %v568 = vsel %vm565, %v567, %v563
    %v569 = vmul.f32 %v479, %v568
    %v570 = vrcp.pop %v513
    %v571 = vmul.f32 %v513, %v570
    %v572 = vsub.f32 1.0, %v571
    %v573 = vmul.f32 %v570, %v572
    %v574 = vadd.f32 %v570, %v573
    %vm575 = vweird.f32 %v513
    %vm576 = vweird.f32 %v570
    %vm577 = vmor %vm575, %vm576
    %v578 = vsel %vm577, %v570, %v574
    %v579 = vand.u32 2147483647, %v513
    %vm580 = vcmp.eq.f32.partialorder %v579, 8.507059e+37
    %v581 = vand.u32 %v513, 2147483648
    %v582 = vor.u32 1.1754944e-38, %v581
    %v583 = vsel %vm580, %v582, %v578
    %v584 = vmul.f32 %v481, %v583
    %v585 = vrcp.pop %v515
    %v586 = vmul.f32 %v515, %v585
    %v587 = vsub.f32 1.0, %v586
    %v588 = vmul.f32 %v585, %v587
    %v589 = vadd.f32 %v585, %v588
    %vm590 = vweird.f32 %v515
    %vm591 = vweird.f32 %v585
    %vm592 = vmor %vm590, %vm591
    %v593 = vsel %vm592, %v585, %v589
    %v594 = vand.u32 2147483647, %v515
    %vm595 = vcmp.eq.f32.partialorder %v594, 8.507059e+37
    %v596 = vand.u32 %v515, 2147483648
    %v597 = vor.u32 1.1754944e-38, %v596
    %v598 = vsel %vm595, %v597, %v593
    %v599 = vmul.f32 %v483, %v598
    %v600 = vrcp.pop %v517
    %v601 = vmul.f32 %v517, %v600
    %v602 = vsub.f32 1.0, %v601
    %v603 = vmul.f32 %v600, %v602
    %v604 = vadd.f32 %v600, %v603
    %vm605 = vweird.f32 %v517
    %vm606 = vweird.f32 %v600
    %vm607 = vmor %vm605, %vm606
    %v608 = vsel %vm607, %v600, %v604
    %v609 = vand.u32 2147483647, %v517
    %vm610 = vcmp.eq.f32.partialorder %v609, 8.507059e+37
    %v611 = vand.u32 %v517, 2147483648
    %v612 = vor.u32 1.1754944e-38, %v611
    %v613 = vsel %vm610, %v612, %v608
    %v614 = vmul.f32 %v485, %v613
    %v615 = vrcp.pop %v519
    %v616 = vmul.f32 %v519, %v615
    %v617 = vsub.f32 1.0, %v616
    %v618 = vmul.f32 %v615, %v617
    %v619 = vadd.f32 %v615, %v618
    %vm620 = vweird.f32 %v519
    %vm621 = vweird.f32 %v615
    %vm622 = vmor %vm620, %vm621
    %v623 = vsel %vm622, %v615, %v619
    %v624 = vand.u32 2147483647, %v519
    %vm625 = vcmp.eq.f32.partialorder %v624, 8.507059e+37
    %v626 = vand.u32 %v519, 2147483648
    %v627 = vor.u32 1.1754944e-38, %v626
    %v628 = vsel %vm625, %v627, %v623
    %v629 = vmul.f32 %v487, %v628
    %v630 = vrcp.pop %v521
    %v631 = vmul.f32 %v521, %v630
    %v632 = vsub.f32 1.0, %v631
    %v633 = vmul.f32 %v630, %v632
    %v634 = vadd.f32 %v630, %v633
    %vm635 = vweird.f32 %v521
    %vm636 = vweird.f32 %v630
    %vm637 = vmor %vm635, %vm636
    %v638 = vsel %vm637, %v630, %v634
    %v639 = vand.u32 2147483647, %v521
    %vm640 = vcmp.eq.f32.partialorder %v639, 8.507059e+37
    %v641 = vand.u32 %v521, 2147483648
    %v642 = vor.u32 1.1754944e-38, %v641
    %v643 = vsel %vm640, %v642, %v638
    %v644 = vmul.f32 %v489, %v643
    %v645 = vrcp.pop %v523
    %v646 = vmul.f32 %v523, %v645
    %v647 = vsub.f32 1.0, %v646
    %v648 = vmul.f32 %v645, %v647
    %v649 = vadd.f32 %v645, %v648
    %vm650 = vweird.f32 %v523
    %vm651 = vweird.f32 %v645
    %vm652 = vmor %vm650, %vm651
    %v653 = vsel %vm652, %v645, %v649
    %v654 = vand.u32 2147483647, %v523
    %vm655 = vcmp.eq.f32.partialorder %v654, 8.507059e+37
    %v656 = vand.u32 %v523, 2147483648
    %v657 = vor.u32 1.1754944e-38, %v656
    %v658 = vsel %vm655, %v657, %v653
    %v659 = vmul.f32 %v491, %v658
    %v660 = vrcp.pop %v525
    %v661 = vmul.f32 %v525, %v660
    %v662 = vsub.f32 1.0, %v661
    %v663 = vmul.f32 %v660, %v662
    %v664 = vadd.f32 %v660, %v663
    %vm665 = vweird.f32 %v525
    %vm666 = vweird.f32 %v660
    %vm667 = vmor %vm665, %vm666
    %v668 = vsel %vm667, %v660, %v664
    %v669 = vand.u32 2147483647, %v525
    %vm670 = vcmp.eq.f32.partialorder %v669, 8.507059e+37
    %v671 = vand.u32 %v525, 2147483648
    %v672 = vor.u32 1.1754944e-38, %v671
    %v673 = vsel %vm670, %v672, %v668
    %v674 = vmul.f32 %v493, %v673
    %v675 = vrcp.pop %v527
    %v676 = vmul.f32 %v527, %v675
    %v677 = vsub.f32 1.0, %v676
    %v678 = vmul.f32 %v675, %v677
    %v679 = vadd.f32 %v675, %v678
    %vm680 = vweird.f32 %v527
    %vm681 = vweird.f32 %v675
    %vm682 = vmor %vm680, %vm681
    %v683 = vsel %vm682, %v675, %v679
    %v684 = vand.u32 2147483647, %v527
    %vm685 = vcmp.eq.f32.partialorder %v684, 8.507059e+37
    %v686 = vand.u32 %v527, 2147483648
    %v687 = vor.u32 1.1754944e-38, %v686
    %v688 = vsel %vm685, %v687, %v683
    %v689 = vmul.f32 %v495, %v688
    %v690 = vrcp.pop %v529
    %v691 = vmul.f32 %v529, %v690
    %v692 = vsub.f32 1.0, %v691
    %v693 = vmul.f32 %v690, %v692
    %v694 = vadd.f32 %v690, %v693
    %vm695 = vweird.f32 %v529
    %vm696 = vweird.f32 %v690
    %vm697 = vmor %vm695, %vm696
    %v698 = vsel %vm697, %v690, %v694
    %v699 = vand.u32 2147483647, %v529
    %vm700 = vcmp.eq.f32.partialorder %v699, 8.507059e+37
    %v701 = vand.u32 %v529, 2147483648
    %v702 = vor.u32 1.1754944e-38, %v701
    %v703 = vsel %vm700, %v702, %v698
    %v704 = vmul.f32 %v497, %v703
    %v705 = vrcp.pop %v531
    %v706 = vmul.f32 %v531, %v705
    %v707 = vsub.f32 1.0, %v706
    %v708 = vmul.f32 %v705, %v707
    %v709 = vadd.f32 %v705, %v708
    %vm710 = vweird.f32 %v531
    %vm711 = vweird.f32 %v705
    %vm712 = vmor %vm710, %vm711
    %v713 = vsel %vm712, %v705, %v709
    %v714 = vand.u32 2147483647, %v531
    %vm715 = vcmp.eq.f32.partialorder %v714, 8.507059e+37
    %v716 = vand.u32 %v531, 2147483648
    %v717 = vor.u32 1.1754944e-38, %v716
    %v718 = vsel %vm715, %v717, %v713
    %v719 = vmul.f32 %v499, %v718
    %v720 = vrcp.pop %v533
    %v721 = vmul.f32 %v533, %v720
    %v722 = vsub.f32 1.0, %v721
    %v723 = vmul.f32 %v720, %v722
    %v724 = vadd.f32 %v720, %v723
    %vm725 = vweird.f32 %v533
    %vm726 = vweird.f32 %v720
    %vm727 = vmor %vm725, %vm726
    %v728 = vsel %vm727, %v720, %v724
    %v729 = vand.u32 2147483647, %v533
    %vm730 = vcmp.eq.f32.partialorder %v729, 8.507059e+37
    %v731 = vand.u32 %v533, 2147483648
    %v732 = vor.u32 1.1754944e-38, %v731
    %v733 = vsel %vm730, %v732, %v728
    %v734 = vmul.f32 %v501, %v733
    %v735 = vrcp.pop %v535
    %v736 = vmul.f32 %v535, %v735
    %v737 = vsub.f32 1.0, %v736
    %v738 = vmul.f32 %v735, %v737
    %v739 = vadd.f32 %v735, %v738
    %vm740 = vweird.f32 %v535
    %vm741 = vweird.f32 %v735
    %vm742 = vmor %vm740, %vm741
    %v743 = vsel %vm742, %v735, %v739
    %v744 = vand.u32 2147483647, %v535
    %vm745 = vcmp.eq.f32.partialorder %v744, 8.507059e+37
    %v746 = vand.u32 %v535, 2147483648
    %v747 = vor.u32 1.1754944e-38, %v746
    %v748 = vsel %vm745, %v747, %v743
    %v749 = vmul.f32 %v503, %v748
    %v750 = vrcp.pop %v537
    %v751 = vmul.f32 %v537, %v750
    %v752 = vsub.f32 1.0, %v751
    %v753 = vmul.f32 %v750, %v752
    %v754 = vadd.f32 %v750, %v753
    %vm755 = vweird.f32 %v537
    %vm756 = vweird.f32 %v750
    %vm757 = vmor %vm755, %vm756
    %v758 = vsel %vm757, %v750, %v754
    %v759 = vand.u32 2147483647, %v537
    %vm760 = vcmp.eq.f32.partialorder %v759, 8.507059e+37
    %v761 = vand.u32 %v537, 2147483648
    %v762 = vor.u32 1.1754944e-38, %v761
    %v763 = vsel %vm760, %v762, %v758
    %v764 = vmul.f32 %v505, %v763
    %v765 = vrcp.pop %v539
    %v766 = vmul.f32 %v539, %v765
    %v767 = vsub.f32 1.0, %v766
    %v768 = vmul.f32 %v765, %v767
    %v769 = vadd.f32 %v765, %v768
    %vm770 = vweird.f32 %v539
    %vm771 = vweird.f32 %v765
    %vm772 = vmor %vm770, %vm771
    %v773 = vsel %vm772, %v765, %v769
    %v774 = vand.u32 2147483647, %v539
    %vm775 = vcmp.eq.f32.partialorder %v774, 8.507059e+37
    %v776 = vand.u32 %v539, 2147483648
    %v777 = vor.u32 1.1754944e-38, %v776
    %v778 = vsel %vm775, %v777, %v773
    %v779 = vmul.f32 %v507, %v778
    %780 = vxpose.xlu0.b32.start [1/16] %v554, 128
    %781 = vxpose.xlu0.b32.cont [2/16] %v569, 128
    %782 = vxpose.xlu0.b32.cont [3/16] %v584, 128
    %783 = vxpose.xlu0.b32.cont [4/16] %v599, 128
    %784 = vxpose.xlu0.b32.cont [5/16] %v614, 128
    %785 = vxpose.xlu0.b32.cont [6/16] %v629, 128
    %786 = vxpose.xlu0.b32.cont [7/16] %v644, 128
    %787 = vxpose.xlu0.b32.cont [8/16] %v659, 128
    %788 = vxpose.xlu0.b32.cont [9/16] %v674, 128
    %789 = vxpose.xlu0.b32.cont [10/16] %v689, 128
    %790 = vxpose.xlu0.b32.cont [11/16] %v704, 128
    %791 = vxpose.xlu0.b32.cont [12/16] %v719, 128
    %792 = vxpose.xlu0.b32.cont [13/16] %v734, 128
    %793 = vxpose.xlu0.b32.cont [14/16] %v749, 128
    %794 = vxpose.xlu0.b32.cont [15/16] %v764, 128
    %795 = vxpose.xlu0.b32.end [16/16] %v779, 128
    %v796 = vpop.trf.xlu0
    %v797 = vpop.trf.xlu0
    %v798 = vpop.trf.xlu0
    %v799 = vpop.trf.xlu0
    %v800 = vpop.trf.xlu0
    %v801 = vpop.trf.xlu0
    %v802 = vpop.trf.xlu0
    %v803 = vpop.trf.xlu0
    %v804 = vpop.trf.xlu0
    %v805 = vpop.trf.xlu0
    %v806 = vpop.trf.xlu0
    %v807 = vpop.trf.xlu0
    %v808 = vpop.trf.xlu0
    %v809 = vpop.trf.xlu0
    %v810 = vpop.trf.xlu0
    %v811 = vpop.trf.xlu0
    %812 = vst [vmem:[#allocation2] sm:$0xff] %v796
    // Predicated region
    $region30: #{tpu_custom_call.1} parent=1 // pred_check
      _
    $region31: #{tpu_custom_call.1} parent=1 // pred_check_branch
      %814 = sbr.rel (0) target = $region33
    $region32: #{tpu_custom_call.1} parent=1 // pred_region
      %816 = vsyncadd [#allocation3], 0
      %s818 = sshll.u32 [#allocation2], 4
      %s819 = int_to_ptr.vmem [resolvable:$true] %s818
      %s820 = sshll.u32 %s7, 4
      %s821 = int_to_ptr.hbm [resolvable:$true] %s820
      %823 = dma.vmem_to_hbm [thread:$0]  %s819, 128, %s821, [#allocation3]
    $region33: #{tpu_custom_call.1} parent=1 // pred_fallthru
      _
    // Predicated region
    $region34: #{tpu_custom_call.1} parent=1 // pred_check
      _
    $region35: #{tpu_custom_call.1} parent=1 // pred_check_branch
      %825 = sbr.rel (0) target = $region37
    $region36: #{tpu_custom_call.1} parent=1 // pred_region
      %827 = dma.done [#allocation3], 128
    $region37: #{tpu_custom_call.1} parent=1 // pred_fallthru
      _
    %828 = vsyncpa [#allocation3], 1

</llo_original>
